<compile_context>
chip_gen: v5e
topology: v5e:2x2
jax: 0.10.0
libtpu: 0.0.40
codegen_flags: <defaults>
</compile_context>

<pallas_src>
import jax
import jax.numpy as jnp
from jax.experimental import pallas as pl
from jax.experimental.pallas import tpu as pltpu

_LANE = 128
_SUBLANE = 8


def _cdiv(a, b):
    return -(-a // b)


def _round_up(v, m):
    return _cdiv(v, m) * m


def _sublane_multiple(dtype):
    # Rows per native (sublane, lane) tile: f32/i32 -> 8, bf16 -> 16, int8 -> 32.
    return max(_SUBLANE, 32 // jnp.dtype(dtype).itemsize)


def _chip_hint():
    """Best-effort TPU generation probe: (#TensorCores per chip, max block rows)."""
    try:
        kind = (jax.devices()[0].device_kind or "").lower()
    except Exception:
        kind = ""
    if "v7" in kind or "7x" in kind:
        # v7x: two TensorCores and 3.2 TB/s HBM -> bigger blocks + 2-way core split.
        return 2, 6144
    # v5e / v6e: one TensorCore; 4096 rows = 2 MiB per f32 input block.
    return 1, 4096


def _flatten_raw(a):
    """Flatten; keep a kernel-friendly raw dtype (no wrapper-side f32 upcast pass)."""
    a = jnp.reshape(a, (-1,))
    if a.dtype == jnp.bool_:
        return a.astype(jnp.int8)  # 1 B/elem stream; widened to f32 inside the kernel
    if a.dtype in (jnp.dtype(jnp.float32), jnp.dtype(jnp.bfloat16),
                   jnp.dtype(jnp.int8), jnp.dtype(jnp.uint8), jnp.dtype(jnp.int32)):
        return a
    return a.astype(jnp.float32)


def _make_kernel(n_valid, block_rows, inner_per_core, needs_mask):
    """Kernel accumulating sum(softplus_part), sum(x*y), sum(x+y) over the grid."""
    block_elems = block_rows * _LANE

    def kernel(x_ref, y_ref, o_ref, acc_sp, acc_xy, acc_xpy):
        step = pl.program_id(1)

        @pl.when(step == 0)
        def _init():
            acc_sp[...] = jnp.zeros_like(acc_sp)
            acc_xy[...] = jnp.zeros_like(acc_xy)
            acc_xpy[...] = jnp.zeros_like(acc_xpy)

        x = x_ref[...].astype(jnp.float32)
        y = y_ref[...].astype(jnp.float32)

        if needs_mask:
            # Logical (un-clamped) element offset of this block.  Elements at or
            # past n_valid are boundary-DMA garbage / pad and must not count.
            # (Assumes n_valid < 2**31: int32 element indexing.)
            blk = pl.program_id(0) * inner_per_core + step
            elem0 = blk * block_elems
            rid = jax.lax.broadcasted_iota(jnp.int32, (block_rows, _LANE), 0)
            cid = jax.lax.broadcasted_iota(jnp.int32, (block_rows, _LANE), 1)
            mask = (elem0 + rid * _LANE + cid) < n_valid
            x = jnp.where(mask, x, 0.0)
            y = jnp.where(mask, y, 0.0)

        def lane_partial(v):  # (block_rows, 128) -> (8, 128): vreg-wise adds only
            return jnp.sum(v.reshape(-1, _SUBLANE, _LANE), axis=0)

        # Consume each block-sized temporary immediately to keep the VMEM
        # live-set small with 2-3 MiB blocks.
        acc_xy[...] += lane_partial(x * y)   # intersection (raw logits, like PyTorch)
        acc_xpy[...] += lane_partial(x + y)  # only x_sum + y_sum is ever needed
        # Stable BCEWithLogits minus its x*y term (added back in the wrapper).
        sp = jnp.maximum(x, 0.0) + jnp.log1p(jnp.exp(-jnp.abs(x)))
        if needs_mask:
            sp = jnp.where(mask, sp, 0.0)    # masked x=0 would contribute log(2)
        acc_sp[...] += lane_partial(sp)

        @pl.when(step == pl.num_programs(1) - 1)
        def _finalize():
            # One cross-lane (XLU) reduction per quantity, only in the epilogue.
            o_ref[0, 0] = jnp.sum(acc_sp[...])
            o_ref[0, 1] = jnp.sum(acc_xy[...])
            o_ref[0, 2] = jnp.sum(acc_xpy[...])

    return kernel


def bce_dice_loss(x, y, smooth=1.0):
    """JAX/Pallas equivalent of BCEDiceLoss().forward(x, y)."""
    n = x.size
    assert y.size == n and n > 0

    xf = _flatten_raw(x)
    yf = _flatten_raw(y)

    cores, max_block_rows = _chip_hint()
    req_sub = max(_sublane_multiple(xf.dtype), _sublane_multiple(yf.dtype))

    rows = _cdiv(n, _LANE)
    if rows > max_block_rows:
        # Large tensors: fixed big blocks (multiple of 32 -> valid for f32/bf16/int8);
        # the ragged row/block tail is masked inside the kernel, no padding copy.
        block_rows = max_block_rows
        arr_rows = rows
    else:
        # Small tensors (<= one block): a single full-extent block whose rows are
        # rounded to the dtype tile.  Padding here touches at most a few MiB.
        block_rows = _round_up(rows, req_sub)
        arr_rows = block_rows

    pad = arr_rows * _LANE - n
    if pad:
        # Rare path (n not a multiple of 128, or tiny tensor): one extra HBM copy.
        xf = jnp.pad(xf, (0, pad))
        yf = jnp.pad(yf, (0, pad))
    xp = xf.reshape(arr_rows, _LANE)  # free bitcast reshape when pad == 0
    yp = yf.reshape(arr_rows, _LANE)

    num_blocks = _cdiv(arr_rows, block_rows)
    core_split = cores if (cores > 1 and num_blocks > 1) else 1
    inner_per_core = _cdiv(num_blocks, core_split)
    covered = core_split * inner_per_core * block_rows * _LANE
    needs_mask = covered != n
    last_block = num_blocks - 1

    def in_index_map(p, i):
        b = p * inner_per_core + i
        # Steps past the real data (odd block count split over two cores) are
        # clamped onto the last block; the in-kernel mask (computed from the
        # *logical* index) zeroes their contribution.
        return (jnp.minimum(b, last_block), 0)

    in_spec = pl.BlockSpec((block_rows, _LANE), in_index_map)

    if core_split > 1 and hasattr(pltpu, "CORE_PARALLEL") and hasattr(pltpu, "ARBITRARY"):
        # v7x: make the 2-TensorCore split explicit.
        dim_sem = (pltpu.CORE_PARALLEL, pltpu.ARBITRARY)
    else:
        dim_sem = ("parallel", "arbitrary")

    f32_block_bytes = block_rows * _LANE * 4
    in_block_bytes = block_rows * _LANE * (xp.dtype.itemsize + yp.dtype.itemsize)
    # Double-buffered inputs + ~8 f32-block-sized elementwise temporaries + slack,
    # clipped to stay inside every generation's physical VMEM.
    vmem_limit = int(min(56 << 20,
                         max(24 << 20,
                             2 * in_block_bytes + 8 * f32_block_bytes + (8 << 20))))

    partials = pl.pallas_call(
        _make_kernel(n, block_rows, inner_per_core, needs_mask),
        out_shape=jax.ShapeDtypeStruct((core_split, 3), jnp.float32),
        grid=(core_split, inner_per_core),
        in_specs=[in_spec, in_spec],
        out_specs=pl.BlockSpec((1, 3), lambda p, i: (p, 0),
                               memory_space=pltpu.MemorySpace.SMEM),
        scratch_shapes=[pltpu.VMEM((_SUBLANE, _LANE), jnp.float32)] * 3,
        compiler_params=pltpu.CompilerParams(
            dimension_semantics=dim_sem,
            vmem_limit_bytes=vmem_limit),
        cost_estimate=pl.CostEstimate(
            flops=12 * n, transcendentals=2 * n,
            bytes_accessed=(xp.size * xp.dtype.itemsize
                            + yp.size * yp.dtype.itemsize
                            + core_split * 3 * 4)),
    )(xp, yp)

    sums = jnp.sum(partials, axis=0)  # combine per-core partial sums
    sp_sum, intersection, xpy_sum = sums[0], sums[1], sums[2]

    bce_sum = sp_sum - intersection            # sum of max(x,0) - x*y + log1p(exp(-|x|))
    bce = bce_sum / jnp.float32(n)             # BCEWithLogitsLoss default: mean
    # Dice uses raw logits (no sigmoid), exactly like the PyTorch source.
    dcoeff = (2.0 * intersection + smooth) / (xpy_sum + smooth)
    # TODO(synk): PyTorch upcasts the BCE term with .double() (float64); JAX on TPU
    # keeps float32 here (x64 disabled), values are otherwise identical.
    return bce + (1.0 - dcoeff)


def _reference(x, y, smooth=1.0):
    xf = jnp.reshape(x, (-1,)).astype(jnp.float32)
    yf = jnp.reshape(y, (-1,)).astype(jnp.float32)
    bce = jnp.mean(jnp.maximum(xf, 0.0) - xf * yf + jnp.log1p(jnp.exp(-jnp.abs(xf))))
    dcoeff = (2.0 * jnp.sum(xf * yf) + smooth) / (jnp.sum(xf) + jnp.sum(yf) + smooth)
    return bce + (1.0 - dcoeff)


if __name__ == "__main__":
    key = jax.random.PRNGKey(0)
    kx, ky, kx2, ky2 = jax.random.split(key, 4)

    # UNet-style segmentation head: N=2, C=4, H=W=16 (n = 2048, lane-aligned).
    x = jax.random.normal(kx, (2, 4, 16, 16), dtype=jnp.float32)            # logits
    y = jax.random.bernoulli(ky, 0.5, (2, 4, 16, 16)).astype(jnp.float32)   # targets

    out = jax.block_until_ready(bce_dice_loss(x, y, smooth=1.0))
    ref = _reference(x, y, smooth=1.0)
    assert jnp.allclose(out, ref, rtol=1e-5, atol=1e-5), (out, ref)

    # Second shape: exercises the multi-block path with an in-kernel-masked
    # ragged tail (rows not a multiple of block_rows) and no wrapper-side pad copy.
    x2 = jax.random.normal(kx2, (125, 5120), dtype=jnp.float32)
    y2 = jax.random.bernoulli(ky2, 0.5, (125, 5120)).astype(jnp.float32)
    out2 = jax.block_until_ready(bce_dice_loss(x2, y2, smooth=1.0))
    ref2 = _reference(x2, y2, smooth=1.0)
    assert jnp.allclose(out2, ref2, rtol=1e-4, atol=1e-4), (out2, ref2)

    print("KERNEL_OK")
</pallas_src>

<mosaic_0001>
module attributes {stable_mosaic.version = 11 : i64} {
  func.func @kernel(%arg0: i32, %arg1: i32, %arg2: memref<16x128xf32, #tpu.memory_space<vmem>>, %arg3: memref<16x128xf32, #tpu.memory_space<vmem>>, %arg4: memref<1x3xf32, #tpu.memory_space<smem>>, %arg5: memref<8x128xf32, #tpu.memory_space<vmem>>, %arg6: memref<8x128xf32, #tpu.memory_space<vmem>>, %arg7: memref<8x128xf32, #tpu.memory_space<vmem>>) attributes {dimension_semantics = [#tpu.dimension_semantics<parallel>, #tpu.dimension_semantics<arbitrary>], iteration_bounds = array<i64: 1, 1>, scalar_prefetch = 0 : i64, scratch_operands = 3 : i64, tpu.core_type = #tpu.core_type<tc>, window_params = [{transform_indices = @transform_0, window_bounds = array<i64: 16, 128>}, {transform_indices = @transform_1, window_bounds = array<i64: 16, 128>}, {transform_indices = @transform_2, window_bounds = array<i64: 1, 3>}]} {
    %c0_i32 = arith.constant 0 : i32
    %0 = arith.cmpi eq, %arg1, %c0_i32 : i32
    %1 = arith.extui %0 : i1 to i32
    %c0_i32_0 = arith.constant 0 : i32
    %2 = arith.cmpi ne, %1, %c0_i32_0 : i32
    scf.if %2 {
      %cst_22 = arith.constant 0.000000e+00 : f32
      %33 = vector.broadcast %cst_22 : f32 to vector<8x128xf32>
      %c0_23 = arith.constant 0 : index
      %c0_24 = arith.constant 0 : index
      %34 = vector.load %arg5[%c0_23, %c0_24] : memref<8x128xf32, #tpu.memory_space<vmem>>, vector<8x128xf32>
      tpu.vector_store %arg5[%c0_23, %c0_24], %33 {strides = array<i32>} : memref<8x128xf32, #tpu.memory_space<vmem>>, vector<8x128xf32>,
      %cst_25 = arith.constant 0.000000e+00 : f32
      %35 = vector.broadcast %cst_25 : f32 to vector<8x128xf32>
      %c0_26 = arith.constant 0 : index
      %c0_27 = arith.constant 0 : index
      %36 = vector.load %arg6[%c0_26, %c0_27] : memref<8x128xf32, #tpu.memory_space<vmem>>, vector<8x128xf32>
      tpu.vector_store %arg6[%c0_26, %c0_27], %35 {strides = array<i32>} : memref<8x128xf32, #tpu.memory_space<vmem>>, vector<8x128xf32>,
      %cst_28 = arith.constant 0.000000e+00 : f32
      %37 = vector.broadcast %cst_28 : f32 to vector<8x128xf32>
      %c0_29 = arith.constant 0 : index
      %c0_30 = arith.constant 0 : index
      %38 = vector.load %arg7[%c0_29, %c0_30] : memref<8x128xf32, #tpu.memory_space<vmem>>, vector<8x128xf32>
      tpu.vector_store %arg7[%c0_29, %c0_30], %37 {strides = array<i32>} : memref<8x128xf32, #tpu.memory_space<vmem>>, vector<8x128xf32>,
    } else {
    }
    %c0 = arith.constant 0 : index
    %c0_1 = arith.constant 0 : index
    %3 = vector.load %arg2[%c0, %c0_1] : memref<16x128xf32, #tpu.memory_space<vmem>>, vector<16x128xf32>
    %c0_2 = arith.constant 0 : index
    %c0_3 = arith.constant 0 : index
    %4 = vector.load %arg3[%c0_2, %c0_3] : memref<16x128xf32, #tpu.memory_space<vmem>>, vector<16x128xf32>
    %c0_4 = arith.constant 0 : index
    %c0_5 = arith.constant 0 : index
    %5 = vector.load %arg6[%c0_4, %c0_5] : memref<8x128xf32, #tpu.memory_space<vmem>>, vector<8x128xf32>
    %6 = arith.mulf %3, %4 : vector<16x128xf32>
    %7 = vector.shape_cast %6 : vector<16x128xf32> to vector<2x8x128xf32>
    %cst = arith.constant dense<0.000000e+00> : vector<8x128xf32>
    %8 = vector.multi_reduction <add>, %7, %cst [0] : vector<2x8x128xf32> to vector<8x128xf32>
    %9 = arith.addf %5, %8 : vector<8x128xf32>
    %c0_6 = arith.constant 0 : index
    %c0_7 = arith.constant 0 : index
    %10 = vector.load %arg6[%c0_6, %c0_7] : memref<8x128xf32, #tpu.memory_space<vmem>>, vector<8x128xf32>
    tpu.vector_store %arg6[%c0_6, %c0_7], %9 {strides = array<i32>} : memref<8x128xf32, #tpu.memory_space<vmem>>, vector<8x128xf32>,
    %c0_8 = arith.constant 0 : index
    %c0_9 = arith.constant 0 : index
    %11 = vector.load %arg7[%c0_8, %c0_9] : memref<8x128xf32, #tpu.memory_space<vmem>>, vector<8x128xf32>
    %12 = arith.addf %3, %4 : vector<16x128xf32>
    %13 = vector.shape_cast %12 : vector<16x128xf32> to vector<2x8x128xf32>
    %cst_10 = arith.constant dense<0.000000e+00> : vector<8x128xf32>
    %14 = vector.multi_reduction <add>, %13, %cst_10 [0] : vector<2x8x128xf32> to vector<8x128xf32>
    %15 = arith.addf %11, %14 : vector<8x128xf32>
    %c0_11 = arith.constant 0 : index
    %c0_12 = arith.constant 0 : index
    %16 = vector.load %arg7[%c0_11, %c0_12] : memref<8x128xf32, #tpu.memory_space<vmem>>, vector<8x128xf32>
    tpu.vector_store %arg7[%c0_11, %c0_12], %15 {strides = array<i32>} : memref<8x128xf32, #tpu.memory_space<vmem>>, vector<8x128xf32>,
    %cst_13 = arith.constant 0.000000e+00 : f32
    %17 = vector.broadcast %cst_13 : f32 to vector<16x128xf32>
    %18 = arith.maximumf %3, %17 : vector<16x128xf32>
    %19 = math.absf %3 : vector<16x128xf32>
    %cst_14 = arith.constant 0.000000e+00 : f32
    %20 = vector.broadcast %cst_14 : f32 to vector<16x128xf32>
    %21 = arith.subf %20, %19 : vector<16x128xf32>
    %22 = math.exp %21 : vector<16x128xf32>
    %23 = math.log1p %22 : vector<16x128xf32>
    %24 = arith.addf %18, %23 : vector<16x128xf32>
    %c0_15 = arith.constant 0 : index
    %c0_16 = arith.constant 0 : index
    %25 = vector.load %arg5[%c0_15, %c0_16] : memref<8x128xf32, #tpu.memory_space<vmem>>, vector<8x128xf32>
    %26 = vector.shape_cast %24 : vector<16x128xf32> to vector<2x8x128xf32>
    %cst_17 = arith.constant dense<0.000000e+00> : vector<8x128xf32>
    %27 = vector.multi_reduction <add>, %26, %cst_17 [0] : vector<2x8x128xf32> to vector<8x128xf32>
    %28 = arith.addf %25, %27 : vector<8x128xf32>
    %c0_18 = arith.constant 0 : index
    %c0_19 = arith.constant 0 : index
    %29 = vector.load %arg5[%c0_18, %c0_19] : memref<8x128xf32, #tpu.memory_space<vmem>>, vector<8x128xf32>
    tpu.vector_store %arg5[%c0_18, %c0_19], %28 {strides = array<i32>} : memref<8x128xf32, #tpu.memory_space<vmem>>, vector<8x128xf32>,
    %c0_i32_20 = arith.constant 0 : i32
    %30 = arith.cmpi eq, %arg1, %c0_i32_20 : i32
    %31 = arith.extui %30 : i1 to i32
    %c0_i32_21 = arith.constant 0 : i32
    %32 = arith.cmpi ne, %31, %c0_i32_21 : i32
    scf.if %32 {
      %c0_22 = arith.constant 0 : index
      %c0_23 = arith.constant 0 : index
      %33 = vector.load %arg5[%c0_22, %c0_23] : memref<8x128xf32, #tpu.memory_space<vmem>>, vector<8x128xf32>
      %34 = vector.shape_cast %33 : vector<8x128xf32> to vector<1x8x128xf32>
      %cst_24 = arith.constant dense<0.000000e+00> : vector<1xf32>
      %35 = vector.multi_reduction <add>, %34, %cst_24 [1, 2] : vector<1x8x128xf32> to vector<1xf32>
      %36 = vector.shape_cast %35 : vector<1xf32> to vector<1x1x1xf32>
      %37 = vector.extract %36[0, 0, 0] : f32 from vector<1x1x1xf32>
      %c0_25 = arith.constant 0 : index
      %c0_26 = arith.constant 0 : index
      %38 = memref.load %arg4[%c0_25, %c0_26] : memref<1x3xf32, #tpu.memory_space<smem>>
      memref.store %37, %arg4[%c0_25, %c0_26] : memref<1x3xf32, #tpu.memory_space<smem>>
      %c0_27 = arith.constant 0 : index
      %c0_28 = arith.constant 0 : index
      %39 = vector.load %arg6[%c0_27, %c0_28] : memref<8x128xf32, #tpu.memory_space<vmem>>, vector<8x128xf32>
      %40 = vector.shape_cast %39 : vector<8x128xf32> to vector<1x8x128xf32>
      %cst_29 = arith.constant dense<0.000000e+00> : vector<1xf32>
      %41 = vector.multi_reduction <add>, %40, %cst_29 [1, 2] : vector<1x8x128xf32> to vector<1xf32>
      %42 = vector.shape_cast %41 : vector<1xf32> to vector<1x1x1xf32>
      %43 = vector.extract %42[0, 0, 0] : f32 from vector<1x1x1xf32>
      %c0_30 = arith.constant 0 : index
      %c1 = arith.constant 1 : index
      %44 = memref.load %arg4[%c0_30, %c1] : memref<1x3xf32, #tpu.memory_space<smem>>
      memref.store %43, %arg4[%c0_30, %c1] : memref<1x3xf32, #tpu.memory_space<smem>>
      %c0_31 = arith.constant 0 : index
      %c0_32 = arith.constant 0 : index
      %45 = vector.load %arg7[%c0_31, %c0_32] : memref<8x128xf32, #tpu.memory_space<vmem>>, vector<8x128xf32>
      %46 = vector.shape_cast %45 : vector<8x128xf32> to vector<1x8x128xf32>
      %cst_33 = arith.constant dense<0.000000e+00> : vector<1xf32>
      %47 = vector.multi_reduction <add>, %46, %cst_33 [1, 2] : vector<1x8x128xf32> to vector<1xf32>
      %48 = vector.shape_cast %47 : vector<1xf32> to vector<1x1x1xf32>
      %49 = vector.extract %48[0, 0, 0] : f32 from vector<1x1x1xf32>
      %c0_34 = arith.constant 0 : index
      %c2 = arith.constant 2 : index
      %50 = memref.load %arg4[%c0_34, %c2] : memref<1x3xf32, #tpu.memory_space<smem>>
      memref.store %49, %arg4[%c0_34, %c2] : memref<1x3xf32, #tpu.memory_space<smem>>
    } else {
    }
    return
  }
  func.func @transform_0(%arg0: i32, %arg1: i32) -> (i32, i32) {
    %c1_i32 = arith.constant 1 : i32
    %0 = arith.muli %arg0, %c1_i32 : i32
    %1 = arith.addi %0, %arg1 : i32
    %c0_i32 = arith.constant 0 : i32
    %2 = arith.minsi %1, %c0_i32 : i32
    %c0_i32_0 = arith.constant 0 : i32
    %c0_i32_1 = arith.constant 0 : i32
    return %2, %c0_i32_0 : i32, i32
  }
  func.func @transform_1(%arg0: i32, %arg1: i32) -> (i32, i32) {
    %c1_i32 = arith.constant 1 : i32
    %0 = arith.muli %arg0, %c1_i32 : i32
    %1 = arith.addi %0, %arg1 : i32
    %c0_i32 = arith.constant 0 : i32
    %2 = arith.minsi %1, %c0_i32 : i32
    %c0_i32_0 = arith.constant 0 : i32
    %c0_i32_1 = arith.constant 0 : i32
    return %2, %c0_i32_0 : i32, i32
  }
  func.func @transform_2(%arg0: i32, %arg1: i32) -> (i32, i32) {
    %c0_i32 = arith.constant 0 : i32
    %c0_i32_0 = arith.constant 0 : i32
    return %arg0, %c0_i32 : i32, i32
  }
}

</mosaic_0001>

<llo_original>
// kernel: tpu_custom_call.1
$region0: #{tpu_custom_call.1}
  #allocation0 [shape = 'u32[]', space=smem, size = 0x4, offset = 0x4, fixed_abs, tag = 'smem constant byte address 0x4 - core index']
  #allocation1 [shape = 'u32[72,128]{1,0:T(1,128)}', space=vmem, size = 0x9000, scoped, tag = 'internal scratch']
  #allocation2 [shape = 'f32[8,128]{1,0:T(8,128)}', space=vmem, size = 0x1000, scoped, tag = 'scratch operand']
  #allocation3 [shape = 'f32[8,128]{1,0:T(8,128)}', space=vmem, size = 0x1000, scoped, tag = 'scratch operand']
  #allocation4 [shape = 'f32[8,128]{1,0:T(8,128)}', space=vmem, size = 0x1000, scoped, tag = 'scratch operand']
  %s0 = inlined_call_operand.hbm [shape: f32[16,128], index: 0, kind: input, shape index: {}]
  %s1 = inlined_call_operand.hbm [shape: f32[16,128], index: 1, kind: input, shape index: {}]
  %s2 = inlined_call_operand.hbm [shape: f32[1,3], index: 2, kind: output, shape index: {}]
  %s3 = sld [smem:[#allocation0]]
  $region34: #{tpu_custom_call.1} parent=0
    _
  %s5 = ssub.s32 1, %s3
  %s6 = scalar_select 0, %s5, %s3
  $region1: #{tpu_custom_call.1} parent=0
    #allocation5 [shape = 'u8[8192]{0}', space=vmem, size = 0x2000, scoped, tag = 'input window, operand 0, single buffered']
    #allocation6 [shape = 's32[1]{0}', space=sflag, size = 0x4, scoped, tag = 'scoped memory for tpu_custom_call.1']
    #allocation7 [shape = 's32[1]{0}', space=sflag, size = 0x4, scoped, tag = 'scoped memory for tpu_custom_call.1']
    #allocation8 [shape = 'u8[8192]{0}', space=vmem, size = 0x2000, scoped, tag = 'input window, operand 1, single buffered']
    #allocation9 [shape = 's32[1]{0}', space=sflag, size = 0x4, scoped, tag = 'scoped memory for tpu_custom_call.1']
    #allocation10 [shape = 'u8[512]{0}', space=smem, size = 0x200, scoped, tag = 'output window, operand 0, single buffered']
    %7 = vsyncpa [#allocation6], 0
    %8 = vsyncpa [#allocation9], 0
    %9 = vsyncpa [#allocation7], 0
    // Predicated region
    $region2: #{tpu_custom_call.1} parent=1 // pred_check
      _
    $region3: #{tpu_custom_call.1} parent=1 // pred_check_branch
      %11 = sbr.rel (0) target = $region5
    $region4: #{tpu_custom_call.1} parent=1 // pred_region
      %s12 = sadd.s32 0, 0
      %p13 = scmp.lt.s32.totalorder %s12, 0
      %s14 = scalar_select %p13, %s12, 0
      %s15 = smul.u32 2, %s14
      %17 = vsyncadd [#allocation6], 0
      %s18 = smul.addr %s15, 8
      %s19 = scalar_lea.hbm %s0, %s18
      %s20 = sshll.u32 %s19, 4
      %s21 = int_to_ptr.hbm [resolvable:$true] %s20
      %s22 = sshll.u32 [#allocation5], 4
      %s23 = int_to_ptr.vmem [resolvable:$true] %s22
      %28 = dma.hbm_to_vmem [thread:$0]  %s21, 256, %s23, [#allocation6], 128, 128, 8
    $region5: #{tpu_custom_call.1} parent=1 // pred_fallthru
      _
    // Predicated region
    $region6: #{tpu_custom_call.1} parent=1 // pred_check
      _
    $region7: #{tpu_custom_call.1} parent=1 // pred_check_branch
      %30 = sbr.rel (0) target = $region9
    $region8: #{tpu_custom_call.1} parent=1 // pred_region
      %s31 = sadd.s32 0, 0
      %p32 = scmp.lt.s32.totalorder %s31, 0
      %s33 = scalar_select %p32, %s31, 0
      %s34 = smul.u32 2, %s33
      %36 = vsyncadd [#allocation9], 0
      %s37 = smul.addr %s34, 8
      %s38 = scalar_lea.hbm %s1, %s37
      %s39 = sshll.u32 %s38, 4
      %s40 = int_to_ptr.hbm [resolvable:$true] %s39
      %s41 = sshll.u32 [#allocation8], 4
      %s42 = int_to_ptr.vmem [resolvable:$true] %s41
      %47 = dma.hbm_to_vmem [thread:$0]  %s40, 256, %s42, [#allocation9], 128, 128, 8
    $region9: #{tpu_custom_call.1} parent=1 // pred_fallthru
      _
    // Predicated region
    $region10: #{tpu_custom_call.1} parent=1 // pred_check
      _
    $region11: #{tpu_custom_call.1} parent=1 // pred_check_branch
      %49 = sbr.rel (0) target = $region13
    $region12: #{tpu_custom_call.1} parent=1 // pred_region
      %51 = dma.done [#allocation6], 256
    $region13: #{tpu_custom_call.1} parent=1 // pred_fallthru
      _
    // Predicated region
    $region14: #{tpu_custom_call.1} parent=1 // pred_check
      _
    $region15: #{tpu_custom_call.1} parent=1 // pred_check_branch
      %53 = sbr.rel (0) target = $region17
    $region16: #{tpu_custom_call.1} parent=1 // pred_region
      %55 = dma.done [#allocation9], 256
    $region17: #{tpu_custom_call.1} parent=1 // pred_fallthru
      _
    %s56 = sadd.s32 0, 0
    %p57 = scmp.lt.s32.totalorder %s56, 0
    %s58 = scalar_select %p57, %s56, 0
    %s59 = smul.u32 2, %s58
    %s60 = sadd.s32 0, 0
    %p61 = scmp.lt.s32.totalorder %s60, 0
    %s62 = scalar_select %p61, %s60, 0
    %s63 = smul.u32 2, %s62
    %p64 = scmp.eq.s32.totalorder 0, 0
    // Predicated region
    $region18: #{tpu_custom_call.1} parent=1 // pred_check
      %p65 = pneg %p64
    $region19: #{tpu_custom_call.1} parent=1 // pred_check_branch
      %67 = sbr.rel (%p65) target = $region21
    $region20: #{tpu_custom_call.1} parent=1 // pred_region
      %68 = vst [vmem:[#allocation2] sm:$0xff] 0.0
      %69 = vst [vmem:[#allocation3] sm:$0xff] 0.0
      %70 = vst [vmem:[#allocation4] sm:$0xff] 0.0
    $region21: #{tpu_custom_call.1} parent=1 // pred_fallthru
      _
    %v71 = vld [vmem:[#allocation5] sm:$0xff]
    %v72 = vld [vmem:[#allocation5 + $0x8] sm:$0xff]
    %v73 = vld [vmem:[#allocation8] sm:$0xff]
    %v74 = vld [vmem:[#allocation8 + $0x8] sm:$0xff]
    %v75 = vld [vmem:[#allocation3] sm:$0xff]
    %v76 = vmul.f32 %v71, %v73
    %v77 = vmul.f32 %v72, %v74
    %v78 = vadd.f32 %v76, %v77
    %v79 = vadd.f32 %v75, %v78
    %80 = vst [vmem:[#allocation3] sm:$0xff] %v79
    %v81 = vld [vmem:[#allocation4] sm:$0xff]
    %v82 = vadd.f32 %v71, %v73
    %v83 = vadd.f32 %v72, %v74
    %v84 = vadd.f32 %v82, %v83
    %v85 = vadd.f32 %v81, %v84
    %86 = vst [vmem:[#allocation4] sm:$0xff] %v85
    %v87 = vmax.f32 %v71, 0.0
    %v88 = vmax.f32 %v72, 0.0
    %v89 = vand.u32 2147483647, %v71
    %v90 = vand.u32 2147483647, %v72
    %v91 = vsub.f32 0.0, %v89
    %v92 = vsub.f32 0.0, %v90
    %v93 = vmul.f32 %v91, 1.442695
    %v94 = vpow.pop %v93
    %v95 = vmul.f32 %v92, 1.442695
    %v96 = vpow.pop %v95
    %v97 = vadd.f32 %v94, 1.0
    %v98 = vlog2.pop %v97
    %v99 = vmul.f32 %v98, 0.6931472
    %v100 = vmul.f32 -0.5, %v94
    %v101 = vadd.f32 %v100, 1.0
    %v102 = vmul.f32 %v101, %v94
    %v103 = vand.u32 2147483647, %v94
    %vm104 = vcmp.lt.f32.partialorder %v103, 0.0004427343
    %v105 = vsel %vm104, %v102, %v99
    %v106 = vadd.f32 %v96, 1.0
    %v107 = vlog2.pop %v106
    %v108 = vmul.f32 %v107, 0.6931472
    %v109 = vmul.f32 -0.5, %v96
    %v110 = vadd.f32 %v109, 1.0
    %v111 = vmul.f32 %v110, %v96
    %v112 = vand.u32 2147483647, %v96
    %vm113 = vcmp.lt.f32.partialorder %v112, 0.0004427343
    %v114 = vsel %vm113, %v111, %v108
    %v115 = vadd.f32 %v87, %v105
    %v116 = vadd.f32 %v88, %v114
    %v117 = vld [vmem:[#allocation2] sm:$0xff]
    %v118 = vadd.f32 %v115, %v116
    %v119 = vadd.f32 %v117, %v118
    %120 = vst [vmem:[#allocation2] sm:$0xff] %v119
    // Predicated region
    $region22: #{tpu_custom_call.1} parent=1 // pred_check
      %p121 = pneg %p64
    $region23: #{tpu_custom_call.1} parent=1 // pred_check_branch
      %123 = sbr.rel (%p121) target = $region25
    $region24: #{tpu_custom_call.1} parent=1 // pred_region
      %v124 = vld [vmem:[#allocation2] sm:$0xff]
      %125 = vadd.xlane.f32.xlu0 %v124
      %v126 = vpop.xlane.xlu0 %125
      %v127 = vrot.slane %v126, 4
      %v128 = vadd.f32 %v126, %v127
      %v129 = vrot.slane %v128, 2
      %v130 = vadd.f32 %v128, %v129
      %v131 = vrot.slane %v130, 1
      %v132 = vadd.f32 %v130, %v131
      %s133 = vtos %v132
      %s134 = scalar_lea.smem [#allocation10], 0
      %135 = sst [smem:[%s134]] %s133
      %v136 = vld [vmem:[#allocation3] sm:$0xff]
      %137 = vadd.xlane.f32.xlu0 %v136
      %v138 = vpop.xlane.xlu0 %137
      %v139 = vrot.slane %v138, 4
      %v140 = vadd.f32 %v138, %v139
      %v141 = vrot.slane %v140, 2
      %v142 = vadd.f32 %v140, %v141
      %v143 = vrot.slane %v142, 1
      %v144 = vadd.f32 %v142, %v143
      %s145 = vtos %v144
      %s146 = scalar_lea.smem [#allocation10], 1
      %147 = sst [smem:[%s146]] %s145
      %v148 = vld [vmem:[#allocation4] sm:$0xff]
      %149 = vadd.xlane.f32.xlu0 %v148
      %v150 = vpop.xlane.xlu0 %149
      %v151 = vrot.slane %v150, 4
      %v152 = vadd.f32 %v150, %v151
      %v153 = vrot.slane %v152, 2
      %v154 = vadd.f32 %v152, %v153
      %v155 = vrot.slane %v154, 1
      %v156 = vadd.f32 %v154, %v155
      %s157 = vtos %v156
      %s158 = scalar_lea.smem [#allocation10], 2
      %159 = sst [smem:[%s158]] %s157
    $region25: #{tpu_custom_call.1} parent=1 // pred_fallthru
      _
    // Predicated region
    $region26: #{tpu_custom_call.1} parent=1 // pred_check
      _
    $region27: #{tpu_custom_call.1} parent=1 // pred_check_branch
      %161 = sbr.rel (0) target = $region29
    $region28: #{tpu_custom_call.1} parent=1 // pred_region
      %163 = vsyncadd [#allocation7], 0
      %s165 = sshll.u32 %s2, 4
      %s166 = int_to_ptr.hbm [resolvable:$true] %s165
      %168 = dma.smem_to_hbm [#allocation10], 16, %s166, [#allocation7]
    $region29: #{tpu_custom_call.1} parent=1 // pred_fallthru
      _
    // Predicated region
    $region30: #{tpu_custom_call.1} parent=1 // pred_check
      _
    $region31: #{tpu_custom_call.1} parent=1 // pred_check_branch
      %170 = sbr.rel (0) target = $region33
    $region32: #{tpu_custom_call.1} parent=1 // pred_region
      %172 = dma.done [#allocation7], 16
    $region33: #{tpu_custom_call.1} parent=1 // pred_fallthru
      _
    %173 = sfence
    %174 = vsyncpa [#allocation6], 1
    %175 = vsyncpa [#allocation9], 1
    %176 = vsyncpa [#allocation7], 1

</llo_original>
